<compile_context>
chip_gen: v7x
topology: tpu7x:2x2x1
jax: 0.10.0
libtpu: 0.0.40
codegen_flags: <defaults>
</compile_context>

<pallas_src>
import functools

import jax
import jax.numpy as jnp
from jax.experimental import pallas as pl
from jax.experimental.pallas import tpu as pltpu


def _tap_split(offset, stride, seq_len, l_out):
    """For one tap at time-offset `offset`, split the l_out outputs into
    (n_lo, n_mid, n_hi): outputs whose clamped source is the first row, an
    in-range strided window, and the last row, respectively.  All static."""
    if offset < 0:
        n_lo = min((-offset + stride - 1) // stride, l_out)
    else:
        n_lo = 0
    t_max_valid = (seq_len - 1 - offset) // stride  # last t with in-range source
    n_hi = min(max(0, l_out - 1 - t_max_valid), l_out - n_lo)
    n_mid = l_out - n_lo - n_hi
    return n_lo, n_mid, n_hi


def _moving_avg_flat_kernel(x_ref, o_ref, *, kernel_size, pad, seq_len, l_out,
                            channels):
    # x_ref: (..., seq_len*channels)  time-major/channel-minor on lanes,
    # o_ref: (..., l_out*channels)    batch rows (if any) on sublanes.
    first = x_ref[..., 0:channels].astype(jnp.float32)                   # x[:,0,:]
    last = x_ref[..., (seq_len - 1) * channels:seq_len * channels].astype(
        jnp.float32)                                                      # x[:,-1,:]
    acc = None
    for k in range(kernel_size):
        off = k - pad
        n_lo, n_mid, n_hi = _tap_split(off, 1, seq_len, l_out)
        pieces = [first] * n_lo
        if n_mid > 0:
            start = (n_lo + off) * channels
            pieces.append(
                x_ref[..., pl.ds(start, n_mid * channels)].astype(jnp.float32))
        pieces.extend([last] * n_hi)
        tap = pieces[0] if len(pieces) == 1 else jnp.concatenate(pieces, axis=-1)
        acc = tap if acc is None else acc + tap
    o_ref[...] = (acc * (1.0 / kernel_size)).astype(o_ref.dtype)


def _moving_avg_generic_kernel(x_ref, o_ref, *, kernel_size, stride, pad,
                               seq_len, l_out):
    # x_ref: (seq_len, c_blk); o_ref: (l_out, c_blk) -- channels on lanes.
    c_blk = x_ref.shape[-1]
    first = x_ref[0:1, :].astype(jnp.float32)
    last = x_ref[seq_len - 1:seq_len, :].astype(jnp.float32)
    acc = None
    for k in range(kernel_size):
        off = k - pad
        n_lo, n_mid, n_hi = _tap_split(off, stride, seq_len, l_out)
        pieces = []
        if n_lo > 0:
            pieces.append(jnp.broadcast_to(first, (n_lo, c_blk)))
        if n_mid > 0:
            start = n_lo * stride + off
            if stride == 1:
                mid = x_ref[pl.ds(start, n_mid), :].astype(jnp.float32)
            else:
                # Contiguous ref read of the covering span, then a static
                # strided slice of the (small) value.
                span = (n_mid - 1) * stride + 1
                win = x_ref[pl.ds(start, span), :].astype(jnp.float32)
                mid = jax.lax.slice(win, (0, 0), (span, c_blk), (stride, 1))
            pieces.append(mid)
        if n_hi > 0:
            pieces.append(jnp.broadcast_to(last, (n_hi, c_blk)))
        tap = pieces[0] if len(pieces) == 1 else jnp.concatenate(pieces, axis=0)
        acc = tap if acc is None else acc + tap
    o_ref[...] = (acc * (1.0 / kernel_size)).astype(o_ref.dtype)


def _padded_elems(rows, cols):
    # VMEM footprint (elements) of a (rows, cols) f32 tile padded to (8, 128).
    return ((rows + 7) // 8) * 8 * ((cols + 127) // 128) * 128


# Stay under the most conservative default scoped-VMEM limit (v5e: 16 MiB)
# so we never *have* to raise vmem_limit_bytes on the fast path.
_FLAT_VMEM_BUDGET = 12 * 1024 * 1024
_DEFAULT_SCOPED_VMEM = 16 * 1024 * 1024
_PHYS_VMEM_CAP = 64 * 1024 * 1024  # v7x physical VMEM


def _flat_tile_bytes(rows, lc, oc):
    # double-buffered input + output blocks, 4 B/elem.
    return 2 * 4 * (_padded_elems(rows, lc) + _padded_elems(rows, oc))


def _moving_avg_flat(x, kernel_size, pad, l_out):
    b, l, c = x.shape
    lc, oc = l * c, l_out * c
    kernel = functools.partial(
        _moving_avg_flat_kernel, kernel_size=kernel_size, pad=pad,
        seq_len=l, l_out=l_out, channels=c)

    # Largest batch block that (a) keeps every block full (== b, or a multiple
    # of 8 that divides b -- sublane aligned, no ragged boundary blocks) and
    # (b) fits comfortably in scoped VMEM with double buffering.
    b_blk = None
    if _flat_tile_bytes(b, lc, oc) <= _FLAT_VMEM_BUDGET:
        b_blk = b
    else:
        for cand in range((b // 8) * 8, 0, -8):
            if b % cand == 0 and _flat_tile_bytes(cand, lc, oc) <= _FLAT_VMEM_BUDGET:
                b_blk = cand
                break

    if b_blk is not None:
        x2 = x.reshape(b, lc)  # free: contiguous row-major reshape
        out2 = pl.pallas_call(
            kernel,
            out_shape=jax.ShapeDtypeStruct((b, oc), x.dtype),
            grid_spec=pltpu.PrefetchScalarGridSpec(
                num_scalar_prefetch=0,
                grid=(b // b_blk,),
                in_specs=[pl.BlockSpec((b_blk, lc), lambda i: (i, 0))],
                out_specs=pl.BlockSpec((b_blk, oc), lambda i: (i, 0)),
            ),
            compiler_params=pltpu.CompilerParams(
                dimension_semantics=("parallel",)),
        )(x2)
        return out2.reshape(b, l_out, c)

    # Fallback: one batch row per grid step, (1, L*C) blocks (batch squeezed).
    x3 = x.reshape(b, 1, lc)
    out3 = pl.pallas_call(
        kernel,
        out_shape=jax.ShapeDtypeStruct((b, 1, oc), x.dtype),
        grid_spec=pltpu.PrefetchScalarGridSpec(
            num_scalar_prefetch=0,
            grid=(b,),
            in_specs=[pl.BlockSpec((None, 1, lc), lambda i: (i, 0, 0))],
            out_specs=pl.BlockSpec((None, 1, oc), lambda i: (i, 0, 0)),
        ),
        compiler_params=pltpu.CompilerParams(
            dimension_semantics=("parallel",)),
    )(x3)
    return out3.reshape(b, l_out, c)


def _moving_avg_generic(x, kernel_size, stride, pad, l_out):
    b, l, c = x.shape
    # Halo-free channel tiling when C is large and lane-aligned; otherwise the
    # block spans the full channel dim (still a contiguous HBM slab per batch).
    c_blk = c
    if c > 512 and c % 128 == 0:
        for cand in (512, 384, 256, 128):
            if c % cand == 0:
                c_blk = cand
                break
    n_cb = c // c_blk

    kernel = functools.partial(
        _moving_avg_generic_kernel, kernel_size=kernel_size, stride=stride,
        pad=pad, seq_len=l, l_out=l_out)

    cp_kwargs = dict(dimension_semantics=("parallel", "parallel"))
    need = (2 * 4 * (_padded_elems(l, c_blk) + _padded_elems(l_out, c_blk))
            + (4 << 20))
    if need > _DEFAULT_SCOPED_VMEM:
        cp_kwargs["vmem_limit_bytes"] = int(min(need, _PHYS_VMEM_CAP))

    return pl.pallas_call(
        kernel,
        out_shape=jax.ShapeDtypeStruct((b, l_out, c), x.dtype),
        grid_spec=pltpu.PrefetchScalarGridSpec(
            num_scalar_prefetch=0,
            grid=(b, n_cb),
            in_specs=[pl.BlockSpec((None, l, c_blk), lambda i, j: (i, 0, j))],
            out_specs=pl.BlockSpec((None, l_out, c_blk),
                                   lambda i, j: (i, 0, j)),
        ),
        compiler_params=pltpu.CompilerParams(**cp_kwargs),
    )(x)


def moving_avg(x, kernel_size, stride):
    """x: (B, L, C) -> (B, L_out, C); matches the PyTorch moving_avg module."""
    b, l, c = x.shape
    pad = (kernel_size - 1) // 2
    l_out = (l + 2 * pad - kernel_size) // stride + 1
    if l_out < 1:
        raise ValueError("moving_avg: no valid output positions for this shape")

    # Lane-dense fast path (the DLinear case: stride == 1).  Requires that a
    # single flattened batch row fits in the VMEM budget; otherwise use the
    # generic channel-tiled path.
    if (stride == 1
            and _flat_tile_bytes(1, l * c, l_out * c) <= _FLAT_VMEM_BUDGET):
        return _moving_avg_flat(x, kernel_size, pad, l_out)
    return _moving_avg_generic(x, kernel_size, stride, pad, l_out)


def _reference(x, kernel_size, stride):
    """Pure-JAX reference of the PyTorch forward, for verification."""
    pad = (kernel_size - 1) // 2
    front = jnp.repeat(x[:, 0:1, :], pad, axis=1)
    end = jnp.repeat(x[:, -1:, :], pad, axis=1)
    xp = jnp.concatenate([front, x, end], axis=1)
    l_out = (xp.shape[1] - kernel_size) // stride + 1
    outs = [jnp.mean(xp[:, t * stride:t * stride + kernel_size, :], axis=1)
            for t in range(l_out)]
    return jnp.stack(outs, axis=1)


if __name__ == "__main__":
    key = jax.random.PRNGKey(0)
    B, L, C = 2, 16, 8
    x = jax.random.normal(key, (B, L, C), dtype=jnp.float32)

    # (kernel_size, stride): the DLinear default (odd K, stride 1) hits the
    # lane-dense flat path; even K checks L_out = L - 1; stride 2 exercises
    # the generic (L, C)-block path with strided windows.
    for ks, st in ((5, 1), (4, 1), (5, 2)):
        out = jax.block_until_ready(moving_avg(x, ks, st))
        ref = _reference(x, ks, st)
        assert out.shape == ref.shape, (ks, st, out.shape, ref.shape)
        assert jnp.allclose(out, ref, atol=1e-5, rtol=1e-5), (ks, st, "mismatch")

    # Larger batch (multiple of 8) to exercise the sublane-batched flat path.
    x2 = jax.random.normal(jax.random.PRNGKey(1), (16, 24, 7), dtype=jnp.float32)
    out2 = jax.block_until_ready(moving_avg(x2, 25, 1))
    ref2 = _reference(x2, 25, 1)
    assert out2.shape == ref2.shape
    assert jnp.allclose(out2, ref2, atol=1e-5, rtol=1e-5), "batched mismatch"

    print("KERNEL_OK")
</pallas_src>

<mosaic_0001>
module attributes {stable_mosaic.version = 11 : i64} {
  func.func @_moving_avg_flat_kernel(%arg0: i32, %arg1: memref<2x128xf32, #tpu.memory_space<vmem>>, %arg2: memref<2x128xf32, #tpu.memory_space<vmem>>) attributes {dimension_semantics = [#tpu.dimension_semantics<parallel>], iteration_bounds = array<i64: 1>, scalar_prefetch = 0 : i64, scratch_operands = 0 : i64, tpu.core_type = #tpu.core_type<tc>, window_params = [{transform_indices = @transform_0, window_bounds = array<i64: 2, 128>}, {transform_indices = @transform_1, window_bounds = array<i64: 2, 128>}]} {
    %c0 = arith.constant 0 : index
    %c0_0 = arith.constant 0 : index
    %0 = vector.load %arg1[%c0, %c0_0] : memref<2x128xf32, #tpu.memory_space<vmem>>, vector<2x8xf32>
    %c0_1 = arith.constant 0 : index
    %c120 = arith.constant 120 : index
    %1 = vector.load %arg1[%c0_1, %c120] : memref<2x128xf32, #tpu.memory_space<vmem>>, vector<2x8xf32>
    %c0_2 = arith.constant 0 : index
    %c0_3 = arith.constant 0 : index
    %2 = vector.load %arg1[%c0_2, %c0_3] : memref<2x128xf32, #tpu.memory_space<vmem>>, vector<2x112xf32>
    %3 = tpu.concatenate %0, %0, %2 in 1 : vector<2x8xf32>, vector<2x8xf32>, vector<2x112xf32> -> vector<2x128xf32>
    %c0_4 = arith.constant 0 : index
    %c0_5 = arith.constant 0 : index
    %4 = vector.load %arg1[%c0_4, %c0_5] : memref<2x128xf32, #tpu.memory_space<vmem>>, vector<2x120xf32>
    %5 = tpu.concatenate %0, %4 in 1 : vector<2x8xf32>, vector<2x120xf32> -> vector<2x128xf32>
    %6 = arith.addf %3, %5 : vector<2x128xf32>
    %c0_6 = arith.constant 0 : index
    %c0_7 = arith.constant 0 : index
    %7 = vector.load %arg1[%c0_6, %c0_7] : memref<2x128xf32, #tpu.memory_space<vmem>>, vector<2x128xf32>
    %8 = arith.addf %6, %7 : vector<2x128xf32>
    %c0_8 = arith.constant 0 : index
    %c8 = arith.constant 8 : index
    %9 = vector.load %arg1[%c0_8, %c8] : memref<2x128xf32, #tpu.memory_space<vmem>>, vector<2x120xf32>
    %10 = tpu.concatenate %9, %1 in 1 : vector<2x120xf32>, vector<2x8xf32> -> vector<2x128xf32>
    %11 = arith.addf %8, %10 : vector<2x128xf32>
    %c0_9 = arith.constant 0 : index
    %c16 = arith.constant 16 : index
    %12 = vector.load %arg1[%c0_9, %c16] : memref<2x128xf32, #tpu.memory_space<vmem>>, vector<2x112xf32>
    %13 = tpu.concatenate %12, %1, %1 in 1 : vector<2x112xf32>, vector<2x8xf32>, vector<2x8xf32> -> vector<2x128xf32>
    %14 = arith.addf %11, %13 : vector<2x128xf32>
    %cst = arith.constant 2.000000e-01 : f32
    %15 = vector.broadcast %cst : f32 to vector<2x128xf32>
    %16 = arith.mulf %14, %15 : vector<2x128xf32>
    %c0_10 = arith.constant 0 : index
    %c0_11 = arith.constant 0 : index
    %17 = vector.load %arg2[%c0_10, %c0_11] : memref<2x128xf32, #tpu.memory_space<vmem>>, vector<2x128xf32>
    tpu.vector_store %arg2[%c0_10, %c0_11], %16 {strides = array<i32>} : memref<2x128xf32, #tpu.memory_space<vmem>>, vector<2x128xf32>,
    return
  }
  func.func @transform_0(%arg0: i32) -> (i32, i32) {
    %c0_i32 = arith.constant 0 : i32
    %c0_i32_0 = arith.constant 0 : i32
    return %arg0, %c0_i32 : i32, i32
  }
  func.func @transform_1(%arg0: i32) -> (i32, i32) {
    %c0_i32 = arith.constant 0 : i32
    %c0_i32_0 = arith.constant 0 : i32
    return %arg0, %c0_i32 : i32, i32
  }
}

</mosaic_0001>

<llo_original>
// kernel: tpu_custom_call.1
$region0: #{tpu_custom_call.1}
  #allocation0 [shape = 'u32[]', space=smem, size = 0x4, offset = 0x4, fixed_abs, tag = 'smem constant byte address 0x4 - core index']
  #allocation1 [shape = 'u32[144,128]{1,0:T(1,128)}', space=vmem, size = 0x12000, scoped, tag = 'internal scratch']
  %s0 = inlined_call_operand.hbm [shape: f32[2,128], index: 0, kind: input, shape index: {}]
  %s1 = inlined_call_operand.hbm [shape: f32[2,128], index: 1, kind: output, shape index: {}]
  %s2 = sld [smem:[#allocation0]]
  $region18: #{tpu_custom_call.1} parent=0
    _
  %s4 = ssub.s32 1, %s2
  %s5 = scalar_select 0, %s4, %s2
  $region1: #{tpu_custom_call.1} parent=0
    #allocation2 [shape = 'u8[1024]{0}', space=vmem, size = 0x400, scoped, tag = 'input window, operand 0, single buffered']
    #allocation3 [shape = 's32[1]{0}', space=sflag, size = 0x4, scoped, tag = 'scoped memory for tpu_custom_call.1']
    #allocation4 [shape = 's32[1]{0}', space=sflag, size = 0x4, scoped, tag = 'scoped memory for tpu_custom_call.1']
    #allocation5 [shape = 'u8[1024]{0}', space=vmem, size = 0x400, scoped, tag = 'output window, operand 0, single buffered']
    %6 = vsyncpa [#allocation3], 0
    %7 = vsyncpa [#allocation4], 0
    // Predicated region
    $region2: #{tpu_custom_call.1} parent=1 // pred_check
      _
    $region3: #{tpu_custom_call.1} parent=1 // pred_check_branch
      %9 = sbr.rel (0) target = $region5
    $region4: #{tpu_custom_call.1} parent=1 // pred_region
      %s11 = ssub.s32 32, 32
      %12 = vsyncadd [#allocation3], %s11
      %s14 = sshll.u32 [#allocation2], 4
      %s15 = int_to_ptr.vmem [resolvable:$true] %s14
      %17 = dma.hbm_to_vmem [thread:$0]  %s0, 32, %s15, [#allocation3]
    $region5: #{tpu_custom_call.1} parent=1 // pred_fallthru
      _
    // Predicated region
    $region6: #{tpu_custom_call.1} parent=1 // pred_check
      _
    $region7: #{tpu_custom_call.1} parent=1 // pred_check_branch
      %19 = sbr.rel (0) target = $region9
    $region8: #{tpu_custom_call.1} parent=1 // pred_region
      %20 = dma.done [#allocation3], 32
    $region9: #{tpu_custom_call.1} parent=1 // pred_fallthru
      _
    %v21 = vld [vmem:[#allocation2] sm:$0x3]
    %23 = vrot.lane.b32.xlu0 %v21, 8
    %v24 = vpop.permute.xlu0 %23
    %26 = vrot.lane.b32.xlu0 %v21, 16
    %v27 = vpop.permute.xlu0 %26
    %vm29 = vcmask 64512
    %v30 = vsel %vm29, %v21, %v24
    %vm31 = vcmask 130048
    %v32 = vsel %vm31, %v30, %v27
    %v33 = vadd.f32 %v32, %v30
    %v34 = vadd.f32 %v33, %v21
    %35 = vrot.lane.b32.xlu0 %v21, 120
    %v36 = vpop.permute.xlu0 %35
    %vm38 = vcmask 982016
    %v39 = vsel %vm38, %v36, %v21
    %v40 = vadd.f32 %v34, %v39
    %41 = vrot.lane.b32.xlu0 %v21, 112
    %v42 = vpop.permute.xlu0 %41
    %vm44 = vcmask 916480
    %v45 = vsel %vm44, %v42, %v36
    %v46 = vsel %vm38, %v45, %v21
    %v47 = vadd.f32 %v40, %v46
    %v48 = vmul.f32 %v47, 0.2
    %49 = vst [vmem:[#allocation5] sm:$0x3] %v48
    // Predicated region
    $region10: #{tpu_custom_call.1} parent=1 // pred_check
      _
    $region11: #{tpu_custom_call.1} parent=1 // pred_check_branch
      %51 = sbr.rel (0) target = $region13
    $region12: #{tpu_custom_call.1} parent=1 // pred_region
      %s53 = ssub.s32 32, 32
      %54 = vsyncadd [#allocation4], %s53
      %s56 = sshll.u32 [#allocation5], 4
      %s57 = int_to_ptr.vmem [resolvable:$true] %s56
      %59 = dma.vmem_to_hbm [thread:$0]  %s57, 32, %s1, [#allocation4]
    $region13: #{tpu_custom_call.1} parent=1 // pred_fallthru
      _
    // Predicated region
    $region14: #{tpu_custom_call.1} parent=1 // pred_check
      _
    $region15: #{tpu_custom_call.1} parent=1 // pred_check_branch
      %61 = sbr.rel (0) target = $region17
    $region16: #{tpu_custom_call.1} parent=1 // pred_region
      %62 = dma.done [#allocation4], 32
    $region17: #{tpu_custom_call.1} parent=1 // pred_fallthru
      _
    %63 = vsyncpa [#allocation3], 1
    %64 = vsyncpa [#allocation4], 1

</llo_original>
